<compile_context>
chip_gen: v5e
topology: v5e:2x2
jax: 0.10.0
libtpu: 0.0.40
codegen_flags: <defaults>
</compile_context>

<pallas_src>
import functools

import jax
import jax.numpy as jnp
from jax.experimental import pallas as pl
from jax.experimental.pallas import tpu as pltpu


def pointer_kernel(ah_ref, orig_ref, w_ref, vec_ref, out_ref, *, approx_recip=True):
    # ah_ref  : (1, H, S)   all_hidden[b] in native layout (lanes = S)
    # orig_ref: (1, H, 1)   origin_hidden[b] (column vector)
    # w_ref   : (5H, H)     rows = [W1a ; W1b ; fc1Wa ; fc1Wb ; fc2W]  (compute dtype)
    # vec_ref : (H, 4) f32  cols = [attn_v, fc1_b, fc2_b, ptr_v]
    # out_ref : (1, 1, S)   probs[b]
    H = orig_ref.shape[1]

    ah = ah_ref[0]                                   # (H, S)  storage dtype
    orig = orig_ref[0]                               # (H, 1)
    wdt = w_ref.dtype

    w1a = w_ref[0:H, :]                              # attention W, all_hidden half
    w_og = w_ref[H:3 * H, :]                         # [W1b ; fc1Wa]  (both origin halves)
    fc1wb = w_ref[3 * H:4 * H, :]                    # fc1 W, context half
    fc2w = w_ref[4 * H:5 * H, :]                     # fc2 W

    va = vec_ref[:, 0:1]                             # (H, 1) f32  attention v
    b1 = vec_ref[:, 1:2]                             # fc1 bias
    b2 = vec_ref[:, 2:3]                             # fc2 bias
    vp = vec_ref[:, 3:4]                             # pointer v

    # ---------------- attention: u = tanh(W1a @ ah + W1b @ orig) ------------
    u_lin = jnp.dot(w1a, ah, preferred_element_type=jnp.float32)              # (H, S)
    og = jnp.dot(w_og, orig.astype(wdt), preferred_element_type=jnp.float32)  # (2H, 1)
    w1b_o = og[0:H, :]                               # (H, 1) attention origin term
    fc1a_o = og[H:2 * H, :]                          # (H, 1) fc1 origin term
    # tanh in the storage dtype: bf16 inputs -> bf16 EUP tanh on v6e/v7x.
    u = jnp.tanh((u_lin + w1b_o).astype(ah.dtype))   # (H, S)

    # scores[s] = sum_h v[h] * u[h, s]   (sublane reduction, f32)
    scores = jnp.sum(u * va, axis=0, keepdims=True)  # (1, S)
    scores = scores - jnp.max(scores, axis=1, keepdims=True)
    p = jnp.exp(scores)
    denom = jnp.sum(p, axis=1, keepdims=True)
    if approx_recip:
        attn = p * pl.reciprocal(denom, approx=True)  # EUP slot; ~2^-12 rel. error
    else:
        attn = p / denom                              # exact softmax

    # context[h] = sum_s attn[s] * ah[h, s]   (lane reduction, f32)
    ctx = jnp.sum(ah * attn, axis=1, keepdims=True)  # (H, 1)

    # fc1 (2H -> H) + relu   (origin half already produced by the fused matmul)
    h1 = fc1a_o + jnp.dot(fc1wb, ctx.astype(wdt),
                          preferred_element_type=jnp.float32) + b1
    h1 = jnp.maximum(h1, 0.0)                        # (H, 1) f32
    # fc2 (H -> H) + relu
    h2 = jnp.dot(fc2w, h1.astype(wdt), preferred_element_type=jnp.float32) + b2
    h2 = jnp.maximum(h2, 0.0)                        # (H, 1) f32

    # probs[s] = sum_h ptr_v[h] * tanh(ah[h, s] + h2[h])
    t = jnp.tanh(ah + h2.astype(ah.dtype))           # (H, S) storage-dtype tanh
    out_ref[0] = jnp.sum(t * vp, axis=0, keepdims=True).astype(out_ref.dtype)


def pointer_forward(all_hidden, origin_hidden, params, compute_dtype=None,
                    approx_recip=True):
    """all_hidden: (B, H, S), origin_hidden: (B, H, 1) -> probs (B, S) float32.

    Operand storage dtype defaults to all_hidden.dtype: pass bf16 tensors to
    get bf16 HBM traffic with no extra wrapper cast pass.  MXU accumulation is
    always f32.
    """
    B, H, S = all_hidden.shape
    cdt = jnp.dtype(compute_dtype) if compute_dtype is not None else all_hidden.dtype

    if all_hidden.dtype != cdt:
        # NOTE: this is an extra HBM pass over the dominant tensor; prefer
        # handing all_hidden to this wrapper already in the desired dtype.
        all_hidden = all_hidden.astype(cdt)
    if origin_hidden.dtype != cdt:
        origin_hidden = origin_hidden.astype(cdt)

    # One-time, tiny weight prep (XLA): split the concat-weights into halves and
    # stack everything into a single operand.  Native layout keeps every weight
    # in its original (out, in) orientation -> no transposes anywhere.
    attn_W = params["attn_W"]                        # (H, 2H)
    fc1_w = params["fc1_w"]                          # (H, 2H)
    w_stack = jnp.concatenate(
        [attn_W[:, :H],                              # W1a : attention, all_hidden half
         attn_W[:, H:],                              # W1b : attention, origin half
         fc1_w[:, :H],                               # fc1Wa: origin half
         fc1_w[:, H:],                               # fc1Wb: context half
         params["fc2_w"]],                           # fc2W
        axis=0).astype(cdt)                          # (5H, H)

    vec_stack = jnp.stack(
        [params["attn_v"], params["fc1_b"], params["fc2_b"], params["ptr_v"]],
        axis=1).astype(jnp.float32)                  # (H, 4)

    isz = jnp.dtype(cdt).itemsize
    flops = int(B * (2 * H * H * S + 8 * H * H + 10 * H * S))
    transcendentals = int(B * (2 * H * S + S))
    bytes_accessed = int(B * H * S * isz + B * H * isz + 5 * H * H * isz
                         + 4 * H * 4 + B * S * 4)

    kern = functools.partial(pointer_kernel, approx_recip=approx_recip)

    grid_spec = pltpu.PrefetchScalarGridSpec(
        num_scalar_prefetch=0,
        grid=(B,),
        in_specs=[
            pl.BlockSpec((1, H, S), lambda b: (b, 0, 0)),   # all_hidden[b] (native)
            pl.BlockSpec((1, H, 1), lambda b: (b, 0, 0)),   # origin_hidden[b]
            pl.BlockSpec((5 * H, H), lambda b: (0, 0)),     # stacked weights (resident)
            pl.BlockSpec((H, 4), lambda b: (0, 0)),         # stacked vectors (resident)
        ],
        out_specs=pl.BlockSpec((1, 1, S), lambda b: (b, 0, 0)),
    )

    out3 = pl.pallas_call(
        kern,
        out_shape=jax.ShapeDtypeStruct((B, 1, S), jnp.float32),
        grid_spec=grid_spec,
        compiler_params=pltpu.CompilerParams(
            dimension_semantics=("parallel",),       # megacore sharding over batch
            # Sized against v7x's 64 MiB physical VMEM: double-buffered (H, S)
            # activation blocks + resident weights + f32 intermediates fit with
            # headroom; also fine on 128 MiB v5e/v6e.
            vmem_limit_bytes=48 * 1024 * 1024),
        cost_estimate=pl.CostEstimate(flops=flops,
                                      transcendentals=transcendentals,
                                      bytes_accessed=bytes_accessed),
    )(all_hidden, origin_hidden, w_stack, vec_stack)
    return out3.reshape(B, S)


def pointer_ref(all_hidden, origin_hidden, params):
    """Pure-JAX reference mirroring the PyTorch forward exactly."""
    B, H, S = all_hidden.shape
    dec = jnp.transpose(origin_hidden, (0, 2, 1))[:, 0, :]                    # (B, H)
    hidden = jnp.concatenate(
        [all_hidden, jnp.broadcast_to(dec[:, :, None], (B, H, S))], axis=1)   # (B, 2H, S)
    u = jnp.tanh(jnp.einsum("hk,bks->bhs", params["attn_W"], hidden))
    scores = jnp.einsum("h,bhs->bs", params["attn_v"], u)
    attn = jax.nn.softmax(scores, axis=-1)                                    # (B, S)
    context = jnp.einsum("bs,bhs->bh", attn, all_hidden)                      # (B, H)
    inp = jnp.concatenate([dec, context], axis=1)                             # (B, 2H)
    h = jax.nn.relu(inp @ params["fc1_w"].T + params["fc1_b"])
    h = jax.nn.relu(h @ params["fc2_w"].T + params["fc2_b"])
    t = jnp.tanh(all_hidden + h[:, :, None])
    return jnp.einsum("h,bhs->bs", params["ptr_v"], t)                        # (B, S)


if __name__ == "__main__":
    B, H, S = 4, 32, 8
    key = jax.random.PRNGKey(0)
    ks = jax.random.split(key, 9)
    # Deterministic synthetic parameters (torch zero-inits v/W; small random
    # values here so the test is non-trivial).
    params = {
        "attn_v": 0.1 * jax.random.normal(ks[0], (H,), jnp.float32),
        "attn_W": 0.1 * jax.random.normal(ks[1], (H, 2 * H), jnp.float32),
        "fc1_w":  0.1 * jax.random.normal(ks[2], (H, 2 * H), jnp.float32),
        "fc1_b":  0.1 * jax.random.normal(ks[3], (H,), jnp.float32),
        "fc2_w":  0.1 * jax.random.normal(ks[4], (H, H), jnp.float32),
        "fc2_b":  0.1 * jax.random.normal(ks[5], (H,), jnp.float32),
        "ptr_v":  0.1 * jax.random.normal(ks[6], (H,), jnp.float32),
    }
    all_hidden = jax.random.normal(ks[7], (B, H, S), jnp.float32)
    origin_hidden = jax.random.normal(ks[8], (B, H, 1), jnp.float32)

    ref = pointer_ref(all_hidden, origin_hidden, params)

    # f32 operand storage (tight tolerance; the approx softmax reciprocal is the
    # only deviation from the PyTorch reference).
    out_f32 = jax.block_until_ready(pointer_forward(all_hidden, origin_hidden, params))
    assert out_f32.shape == (B, S)
    assert jnp.allclose(out_f32, ref, atol=2e-3, rtol=2e-3), "f32 kernel mismatch vs reference"

    # bf16 operand storage (f32 MXU accumulation, bf16 tanh), looser tolerance.
    out_bf16 = jax.block_until_ready(
        pointer_forward(all_hidden.astype(jnp.bfloat16),
                        origin_hidden.astype(jnp.bfloat16), params))
    assert jnp.allclose(out_bf16, ref, atol=6e-2, rtol=6e-2), "bf16 kernel mismatch vs reference"

    print("KERNEL_OK")
</pallas_src>

<mosaic_0001>
module attributes {stable_mosaic.version = 11 : i64} {
  func.func @pointer_kernel(%arg0: i32, %arg1: memref<1x32x8xf32, #tpu.memory_space<vmem>>, %arg2: memref<1x32x1xf32, #tpu.memory_space<vmem>>, %arg3: memref<160x32xf32, #tpu.memory_space<vmem>>, %arg4: memref<32x4xf32, #tpu.memory_space<vmem>>, %arg5: memref<1x1x8xf32, #tpu.memory_space<vmem>>) attributes {dimension_semantics = [#tpu.dimension_semantics<parallel>], iteration_bounds = array<i64: 4>, scalar_prefetch = 0 : i64, scratch_operands = 0 : i64, tpu.core_type = #tpu.core_type<tc>, window_params = [{transform_indices = @transform_0, window_bounds = array<i64: 1, 32, 8>}, {transform_indices = @transform_1, window_bounds = array<i64: 1, 32, 1>}, {pipeline_mode = #tpu.pipeline_mode<synchronous>, transform_indices = @transform_2, window_bounds = array<i64: 160, 32>}, {pipeline_mode = #tpu.pipeline_mode<synchronous>, transform_indices = @transform_3, window_bounds = array<i64: 32, 4>}, {transform_indices = @transform_4, window_bounds = array<i64: 1, 1, 8>}]} {
    %c0 = arith.constant 0 : index
    %c0_0 = arith.constant 0 : index
    %c0_1 = arith.constant 0 : index
    %0 = vector.load %arg1[%c0, %c0_0, %c0_1] : memref<1x32x8xf32, #tpu.memory_space<vmem>>, vector<1x32x8xf32>
    %1 = vector.shape_cast %0 : vector<1x32x8xf32> to vector<32x8xf32>
    %c0_2 = arith.constant 0 : index
    %c0_3 = arith.constant 0 : index
    %c0_4 = arith.constant 0 : index
    %2 = vector.load %arg2[%c0_2, %c0_3, %c0_4] : memref<1x32x1xf32, #tpu.memory_space<vmem>>, vector<1x32x1xf32>
    %3 = vector.shape_cast %2 : vector<1x32x1xf32> to vector<32x1xf32>
    %c0_5 = arith.constant 0 : index
    %c0_6 = arith.constant 0 : index
    %4 = vector.load %arg3[%c0_5, %c0_6] : memref<160x32xf32, #tpu.memory_space<vmem>>, vector<32x32xf32>
    %c32 = arith.constant 32 : index
    %c0_7 = arith.constant 0 : index
    %5 = vector.load %arg3[%c32, %c0_7] : memref<160x32xf32, #tpu.memory_space<vmem>>, vector<64x32xf32>
    %c96 = arith.constant 96 : index
    %c0_8 = arith.constant 0 : index
    %6 = vector.load %arg3[%c96, %c0_8] : memref<160x32xf32, #tpu.memory_space<vmem>>, vector<32x32xf32>
    %c128 = arith.constant 128 : index
    %c0_9 = arith.constant 0 : index
    %7 = vector.load %arg3[%c128, %c0_9] : memref<160x32xf32, #tpu.memory_space<vmem>>, vector<32x32xf32>
    %c0_10 = arith.constant 0 : index
    %c0_11 = arith.constant 0 : index
    %8 = vector.load %arg4[%c0_10, %c0_11] : memref<32x4xf32, #tpu.memory_space<vmem>>, vector<32x1xf32>
    %c0_12 = arith.constant 0 : index
    %c1 = arith.constant 1 : index
    %9 = vector.load %arg4[%c0_12, %c1] : memref<32x4xf32, #tpu.memory_space<vmem>>, vector<32x1xf32>
    %c0_13 = arith.constant 0 : index
    %c2 = arith.constant 2 : index
    %10 = vector.load %arg4[%c0_13, %c2] : memref<32x4xf32, #tpu.memory_space<vmem>>, vector<32x1xf32>
    %c0_14 = arith.constant 0 : index
    %c3 = arith.constant 3 : index
    %11 = vector.load %arg4[%c0_14, %c3] : memref<32x4xf32, #tpu.memory_space<vmem>>, vector<32x1xf32>
    %cst = arith.constant dense<0.000000e+00> : vector<32x8xf32>
    %12 = tpu.matmul %4, %1, %cst {dimension_numbers = #tpu.dot_dimension_numbers<[1], [0], [0], [1], [0, 0, 1, 1], [], []>} : vector<32x32xf32>, vector<32x8xf32>, vector<32x8xf32> -> vector<32x8xf32>
    %cst_15 = arith.constant dense<0.000000e+00> : vector<64x1xf32>
    %13 = tpu.matmul %5, %3, %cst_15 {dimension_numbers = #tpu.dot_dimension_numbers<[1], [0], [0], [1], [0, 0, 1, 1], [], []>} : vector<64x32xf32>, vector<32x1xf32>, vector<64x1xf32> -> vector<64x1xf32>
    %14 = vector.extract_strided_slice %13 {offsets = [0, 0], sizes = [32, 1], strides = [1, 1]} : vector<64x1xf32> to vector<32x1xf32>
    %15 = vector.extract_strided_slice %13 {offsets = [32, 0], sizes = [32, 1], strides = [1, 1]} : vector<64x1xf32> to vector<32x1xf32>
    %16 = vector.broadcast %14 : vector<32x1xf32> to vector<32x8xf32>
    %17 = arith.addf %12, %16 : vector<32x8xf32>
    %18 = math.tanh %17 : vector<32x8xf32>
    %19 = vector.broadcast %8 : vector<32x1xf32> to vector<32x8xf32>
    %20 = arith.mulf %18, %19 : vector<32x8xf32>
    %cst_16 = arith.constant dense<0.000000e+00> : vector<8xf32>
    %21 = vector.multi_reduction <add>, %20, %cst_16 [0] : vector<32x8xf32> to vector<8xf32>
    %22 = vector.shape_cast %21 : vector<8xf32> to vector<1x8xf32>
    %cst_17 = arith.constant dense<0xFF800000> : vector<1xf32>
    %23 = vector.multi_reduction <maximumf>, %22, %cst_17 [1] : vector<1x8xf32> to vector<1xf32>
    %24 = vector.shape_cast %23 : vector<1xf32> to vector<1x1xf32>
    %25 = vector.broadcast %24 : vector<1x1xf32> to vector<1x8xf32>
    %26 = arith.subf %22, %25 : vector<1x8xf32>
    %27 = math.exp %26 : vector<1x8xf32>
    %cst_18 = arith.constant dense<0.000000e+00> : vector<1xf32>
    %28 = vector.multi_reduction <add>, %27, %cst_18 [1] : vector<1x8xf32> to vector<1xf32>
    %29 = vector.shape_cast %28 : vector<1xf32> to vector<1x1xf32>
    %30 = tpu.reciprocal %29 {approx = true} : vector<1x1xf32> -> vector<1x1xf32>
    %31 = vector.broadcast %30 : vector<1x1xf32> to vector<1x8xf32>
    %32 = arith.mulf %27, %31 : vector<1x8xf32>
    %33 = vector.broadcast %32 : vector<1x8xf32> to vector<32x8xf32>
    %34 = arith.mulf %1, %33 : vector<32x8xf32>
    %cst_19 = arith.constant dense<0.000000e+00> : vector<32xf32>
    %35 = vector.multi_reduction <add>, %34, %cst_19 [1] : vector<32x8xf32> to vector<32xf32>
    %36 = vector.shape_cast %35 : vector<32xf32> to vector<32x1xf32>
    %cst_20 = arith.constant dense<0.000000e+00> : vector<32x1xf32>
    %37 = tpu.matmul %6, %36, %cst_20 {dimension_numbers = #tpu.dot_dimension_numbers<[1], [0], [0], [1], [0, 0, 1, 1], [], []>} : vector<32x32xf32>, vector<32x1xf32>, vector<32x1xf32> -> vector<32x1xf32>
    %38 = arith.addf %15, %37 : vector<32x1xf32>
    %39 = arith.addf %38, %9 : vector<32x1xf32>
    %cst_21 = arith.constant 0.000000e+00 : f32
    %40 = vector.broadcast %cst_21 : f32 to vector<32x1xf32>
    %41 = arith.maximumf %39, %40 : vector<32x1xf32>
    %cst_22 = arith.constant dense<0.000000e+00> : vector<32x1xf32>
    %42 = tpu.matmul %7, %41, %cst_22 {dimension_numbers = #tpu.dot_dimension_numbers<[1], [0], [0], [1], [0, 0, 1, 1], [], []>} : vector<32x32xf32>, vector<32x1xf32>, vector<32x1xf32> -> vector<32x1xf32>
    %43 = arith.addf %42, %10 : vector<32x1xf32>
    %cst_23 = arith.constant 0.000000e+00 : f32
    %44 = vector.broadcast %cst_23 : f32 to vector<32x1xf32>
    %45 = arith.maximumf %43, %44 : vector<32x1xf32>
    %46 = vector.broadcast %45 : vector<32x1xf32> to vector<32x8xf32>
    %47 = arith.addf %1, %46 : vector<32x8xf32>
    %48 = math.tanh %47 : vector<32x8xf32>
    %49 = vector.broadcast %11 : vector<32x1xf32> to vector<32x8xf32>
    %50 = arith.mulf %48, %49 : vector<32x8xf32>
    %cst_24 = arith.constant dense<0.000000e+00> : vector<8xf32>
    %51 = vector.multi_reduction <add>, %50, %cst_24 [0] : vector<32x8xf32> to vector<8xf32>
    %52 = vector.shape_cast %51 : vector<8xf32> to vector<1x8xf32>
    %c0_25 = arith.constant 0 : index
    %c0_26 = arith.constant 0 : index
    %c0_27 = arith.constant 0 : index
    %53 = vector.load %arg5[%c0_25, %c0_26, %c0_27] : memref<1x1x8xf32, #tpu.memory_space<vmem>>, vector<1x1x8xf32>
    %54 = vector.shape_cast %53 : vector<1x1x8xf32> to vector<1x8xf32>
    %55 = vector.shape_cast %52 : vector<1x8xf32> to vector<1x1x8xf32>
    tpu.vector_store %arg5[%c0_25, %c0_26, %c0_27], %55 {strides = array<i32>} : memref<1x1x8xf32, #tpu.memory_space<vmem>>, vector<1x1x8xf32>,
    return
  }
  func.func @transform_0(%arg0: i32) -> (i32, i32, i32) {
    %c0_i32 = arith.constant 0 : i32
    %c0_i32_0 = arith.constant 0 : i32
    %c0_i32_1 = arith.constant 0 : i32
    return %arg0, %c0_i32, %c0_i32_0 : i32, i32, i32
  }
  func.func @transform_1(%arg0: i32) -> (i32, i32, i32) {
    %c0_i32 = arith.constant 0 : i32
    %c0_i32_0 = arith.constant 0 : i32
    %c0_i32_1 = arith.constant 0 : i32
    return %arg0, %c0_i32, %c0_i32_0 : i32, i32, i32
  }
  func.func @transform_2(%arg0: i32) -> (i32, i32) {
    %c0_i32 = arith.constant 0 : i32
    %c0_i32_0 = arith.constant 0 : i32
    %c0_i32_1 = arith.constant 0 : i32
    return %c0_i32, %c0_i32_0 : i32, i32
  }
  func.func @transform_3(%arg0: i32) -> (i32, i32) {
    %c0_i32 = arith.constant 0 : i32
    %c0_i32_0 = arith.constant 0 : i32
    %c0_i32_1 = arith.constant 0 : i32
    return %c0_i32, %c0_i32_0 : i32, i32
  }
  func.func @transform_4(%arg0: i32) -> (i32, i32, i32) {
    %c0_i32 = arith.constant 0 : i32
    %c0_i32_0 = arith.constant 0 : i32
    %c0_i32_1 = arith.constant 0 : i32
    return %arg0, %c0_i32, %c0_i32_0 : i32, i32, i32
  }
}

</mosaic_0001>

<llo_original>
// kernel: tpu_custom_call.1
$region0: #{tpu_custom_call.1}
  #allocation0 [shape = 'u32[]', space=smem, size = 0x4, offset = 0x4, fixed_abs, tag = 'smem constant byte address 0x4 - core index']
  #allocation1 [shape = 'u32[72,128]{1,0:T(1,128)}', space=vmem, size = 0x9000, scoped, tag = 'internal scratch']
  %s0 = inlined_call_operand.vmem [shape: f32[4,32,8], index: 0, kind: input, shape index: {}]
  %s1 = inlined_call_operand.vmem [shape: f32[4,32,1], index: 1, kind: input, shape index: {}]
  %s2 = inlined_call_operand.vmem [shape: f32[160,32], index: 2, kind: input, shape index: {}]
  %s3 = inlined_call_operand.vmem [shape: f32[32,4], index: 3, kind: input, shape index: {}]
  %s4 = inlined_call_operand.hbm [shape: f32[4,1,8], index: 4, kind: output, shape index: {}]
  %s5 = sld [smem:[#allocation0]]
  $region49: #{tpu_custom_call.1} parent=0
    _
  %s7 = ssub.s32 1, %s5
  %s8 = scalar_select 0, %s7, %s5
  $region1: #{tpu_custom_call.1} parent=0
    #allocation2 [shape = 'u8[1024]{0}', space=vmem, size = 0x400, scoped, tag = 'output window, operand 0']
    #allocation3 [shape = 's32[2]{0}', space=sflag, size = 0x8, scoped, tag = 'scoped memory for tpu_custom_call.1']
    %9 = vsyncpa [#allocation3], 0
    %s10 = scalar_lea.sflag [#allocation3], 1
    %11 = vsyncpa %s10, 0
    loop: start=0, step=1, limit=6
    $region2: #{tpu_custom_call.1} parent=1 // loop_pre_header
      _
    $region3: #{tpu_custom_call.1} parent=1 // loop_header
      %s13 = sphi 0, %s17
      %p14 = scmp.ge.s32.totalorder %s13, 6
      %s23 = sphi 0, %s25
      %s26 = sphi 0, %s23
      %s27 = sphi 0, %s26
      %s43 = sphi 0, %s27
      %s49 = sphi 0, %s51
      %s52 = sphi 0, %s49
      %s53 = sphi 0, %s52
      %s69 = sphi 0, %s53
      %s73 = sphi 0, %s73
      %s75 = sphi 0, %s73
      %s76 = sphi 0, %s75
      %s90 = sphi 0, %s76
      %s94 = sphi 0, %s94
      %s96 = sphi 0, %s94
      %s97 = sphi 0, %s96
      %s111 = sphi 0, %s97
      %s117 = sphi 0, %s119
      %s120 = sphi 0, %s117
      %s121 = sphi 0, %s120
      %s137 = sphi 0, %s121
    $region4: #{tpu_custom_call.1} parent=1 // loop_header_branch
      %16 = sbr.rel (%p14) target = $region8
    $region5: #{tpu_custom_call.1} parent=1 // loop_body
      %s18 = ssub.s32 %s13, 1
      %s19 = ssub.s32 %s13, 2
      %s20 = sadd.s32 %s13, 1
      %s21 = ssub.s32 %s13, %s20
      %p22 = scmp.eq.s32.totalorder %s21, 0
      %s24 = sadd.s32 %s23, 1
      %s25 = scalar_select %p22, %s23, %s24
      %p28 = pneg %p22
      %p29 = scmp.eq.s32.totalorder %s13, 3
      %p30 = por %p28, %p29
      %p31 = scmp.ne.s32.totalorder %s23, %s26
      %p32 = scmp.eq.s32.totalorder %s13, 0
      %p33 = por %p31, %p32
      %p34 = scmp.ne.s32.totalorder %s23, %s26
      %p35 = scmp.eq.s32.totalorder %s18, 3
      %p36 = por %p34, %p35
      %p37 = scmp.ne.s32.totalorder %s26, %s27
      %p38 = scmp.eq.s32.totalorder %s18, 0
      %p39 = por %p37, %p38
      %p40 = scmp.ne.s32.totalorder %s26, %s27
      %p41 = scmp.eq.s32.totalorder %s19, 3
      %p42 = por %p40, %p41
      %p44 = scmp.ne.s32.totalorder %s27, %s43
      %p45 = scmp.eq.s32.totalorder %s19, 0
      %p46 = por %p44, %p45
      %s47 = ssub.s32 %s13, %s20
      %p48 = scmp.eq.s32.totalorder %s47, 0
      %s50 = sadd.s32 %s49, 1
      %s51 = scalar_select %p48, %s49, %s50
      %p54 = pneg %p48
      %p55 = scmp.eq.s32.totalorder %s13, 3
      %p56 = por %p54, %p55
      %p57 = scmp.ne.s32.totalorder %s49, %s52
      %p58 = scmp.eq.s32.totalorder %s13, 0
      %p59 = por %p57, %p58
      %p60 = scmp.ne.s32.totalorder %s49, %s52
      %p61 = scmp.eq.s32.totalorder %s18, 3
      %p62 = por %p60, %p61
      %p63 = scmp.ne.s32.totalorder %s52, %s53
      %p64 = scmp.eq.s32.totalorder %s18, 0
      %p65 = por %p63, %p64
      %p66 = scmp.ne.s32.totalorder %s52, %s53
      %p67 = scmp.eq.s32.totalorder %s19, 3
      %p68 = por %p66, %p67
      %p70 = scmp.ne.s32.totalorder %s53, %s69
      %p71 = scmp.eq.s32.totalorder %s19, 0
      %p72 = por %p70, %p71
      %s74 = sadd.s32 %s73, 1
      %p77 = scmp.eq.s32.totalorder %s13, 3
      %p78 = scmp.ne.s32.totalorder %s73, %s75
      %p79 = scmp.eq.s32.totalorder %s13, 0
      %p80 = por %p78, %p79
      %p81 = scmp.ne.s32.totalorder %s73, %s75
      %p82 = scmp.eq.s32.totalorder %s18, 3
      %p83 = por %p81, %p82
      %p84 = scmp.ne.s32.totalorder %s75, %s76
      %p85 = scmp.eq.s32.totalorder %s18, 0
      %p86 = por %p84, %p85
      %p87 = scmp.ne.s32.totalorder %s75, %s76
      %p88 = scmp.eq.s32.totalorder %s19, 3
      %p89 = por %p87, %p88
      %p91 = scmp.ne.s32.totalorder %s76, %s90
      %p92 = scmp.eq.s32.totalorder %s19, 0
      %p93 = por %p91, %p92
      %s95 = sadd.s32 %s94, 1
      %p98 = scmp.eq.s32.totalorder %s13, 3
      %p99 = scmp.ne.s32.totalorder %s94, %s96
      %p100 = scmp.eq.s32.totalorder %s13, 0
      %p101 = por %p99, %p100
      %p102 = scmp.ne.s32.totalorder %s94, %s96
      %p103 = scmp.eq.s32.totalorder %s18, 3
      %p104 = por %p102, %p103
      %p105 = scmp.ne.s32.totalorder %s96, %s97
      %p106 = scmp.eq.s32.totalorder %s18, 0
      %p107 = por %p105, %p106
      %p108 = scmp.ne.s32.totalorder %s96, %s97
      %p109 = scmp.eq.s32.totalorder %s19, 3
      %p110 = por %p108, %p109
      %p112 = scmp.ne.s32.totalorder %s97, %s111
      %p113 = scmp.eq.s32.totalorder %s19, 0
      %p114 = por %p112, %p113
      %s115 = ssub.s32 %s13, %s20
      %p116 = scmp.eq.s32.totalorder %s115, 0
      %s118 = sadd.s32 %s117, 1
      %s119 = scalar_select %p116, %s117, %s118
      %p122 = pneg %p116
      %p123 = scmp.eq.s32.totalorder %s13, 3
      %p124 = por %p122, %p123
      %p125 = scmp.ne.s32.totalorder %s117, %s120
      %p126 = scmp.eq.s32.totalorder %s13, 0
      %p127 = por %p125, %p126
      %p128 = scmp.ne.s32.totalorder %s117, %s120
      %p129 = scmp.eq.s32.totalorder %s18, 3
      %p130 = por %p128, %p129
      %p131 = scmp.ne.s32.totalorder %s120, %s121
      %p132 = scmp.eq.s32.totalorder %s18, 0
      %p133 = por %p131, %p132
      %p134 = scmp.ne.s32.totalorder %s120, %s121
      %p135 = scmp.eq.s32.totalorder %s19, 3
      %p136 = por %p134, %p135
      %p138 = scmp.ne.s32.totalorder %s121, %s137
      %p139 = scmp.eq.s32.totalorder %s19, 0
      %p140 = por %p138, %p139
      %p141 = scmp.le.s32.totalorder 1, %s13
      %p142 = scmp.lt.s32.totalorder %s13, 5
      %p143 = pnand %p141, %p142
      %p144 = pneg %p143
      // Predicated region
      $region9: #{tpu_custom_call.1} parent=5 // pred_check
        _
      $region10: #{tpu_custom_call.1} parent=5 // pred_check_branch
        %146 = sbr.rel (%p143) target = $region12
      $region11: #{tpu_custom_call.1} parent=5 // pred_region
        %s147 = ssub.s32 %s13, 1
        // Predicated region
        $region13: #{tpu_custom_call.1} parent=11 // pred_check
          %p148 = pneg %p86
        $region14: #{tpu_custom_call.1} parent=11 // pred_check_branch
          %150 = sbr.rel (%p148) target = $region16
        $region15: #{tpu_custom_call.1} parent=11 // pred_region
          _
        $region16: #{tpu_custom_call.1} parent=11 // pred_fallthru
          _
        // Predicated region
        $region17: #{tpu_custom_call.1} parent=11 // pred_check
          %p151 = pneg %p107
        $region18: #{tpu_custom_call.1} parent=11 // pred_check_branch
          %153 = sbr.rel (%p151) target = $region20
        $region19: #{tpu_custom_call.1} parent=11 // pred_region
          _
        $region20: #{tpu_custom_call.1} parent=11 // pred_fallthru
          _
      $region12: #{tpu_custom_call.1} parent=5 // pred_fallthru
        _
      %p154 = scmp.lt.s32.totalorder %s13, 4
      // Predicated region
      $region21: #{tpu_custom_call.1} parent=5 // pred_check
        %p155 = pneg %p154
      $region22: #{tpu_custom_call.1} parent=5 // pred_check_branch
        %157 = sbr.rel (%p155) target = $region24
      $region23: #{tpu_custom_call.1} parent=5 // pred_region
        // Predicated region
        $region25: #{tpu_custom_call.1} parent=23 // pred_check
          %p158 = pneg %p33
        $region26: #{tpu_custom_call.1} parent=23 // pred_check_branch
          %160 = sbr.rel (%p158) target = $region28
        $region27: #{tpu_custom_call.1} parent=23 // pred_region
          %p161 = scmp.lt.s32.totalorder %s13, 3
          %s162 = scalar_select %p161, %s13, 3
          %s163 = smul.addr %s162, 4
          %s164 = smul.addr %s163, 8
          %s165 = scalar_lea.vmem %s0, %s164
        $region28: #{tpu_custom_call.1} parent=23 // pred_fallthru
          _
        // Predicated region
        $region29: #{tpu_custom_call.1} parent=23 // pred_check
          %p166 = pneg %p59
        $region30: #{tpu_custom_call.1} parent=23 // pred_check_branch
          %168 = sbr.rel (%p166) target = $region32
        $region31: #{tpu_custom_call.1} parent=23 // pred_region
          %p169 = scmp.lt.s32.totalorder %s13, 3
          %s170 = scalar_select %p169, %s13, 3
          %s171 = smul.addr %s170, 4
          %s172 = smul.addr %s171, 8
          %s173 = scalar_lea.vmem %s1, %s172
        $region32: #{tpu_custom_call.1} parent=23 // pred_fallthru
          _
      $region24: #{tpu_custom_call.1} parent=5 // pred_fallthru
        _
      %p174 = scmp.le.s32.totalorder 1, %s13
      %p175 = scmp.lt.s32.totalorder %s13, 5
      %p176 = pnand %p174, %p175
      %p177 = pneg %p176
      // Predicated region
      $region33: #{tpu_custom_call.1} parent=5 // pred_check
        _
      $region34: #{tpu_custom_call.1} parent=5 // pred_check_branch
        %179 = sbr.rel (%p176) target = $region36
      $region35: #{tpu_custom_call.1} parent=5 // pred_region
        %s180 = ssub.s32 %s13, 1
        %p181 = scmp.lt.s32.totalorder %s18, 3
        %s182 = scalar_select %p181, %s18, 3
        %s183 = smul.addr %s182, 4
        %s184 = smul.addr %s183, 8
        %s185 = scalar_lea.vmem %s0, %s184
        %p186 = pneg %p39
        %p187 = pneg %p36
        %p188 = scmp.lt.s32.totalorder %s18, 3
        %s189 = scalar_select %p188, %s18, 3
        %s190 = smul.addr %s189, 4
        %s191 = smul.addr %s190, 8
        %s192 = scalar_lea.vmem %s1, %s191
        %p193 = pneg %p65
        %p194 = pneg %p62
        %p195 = pneg %p86
        %p196 = pneg %p83
        %p197 = pneg %p107
        %p198 = pneg %p104
        %p199 = pneg %p133
        %p200 = pneg %p130
        %s201 = sand.u32 %s120, 1
        %s202 = scalar_lea.sflag [#allocation3], %s201
        %s203 = sand.u32 %s120, 1
        %s204 = scalar_lea.vmem [#allocation2], %s203
        %p205 = scmp.lt.s32.totalorder %s18, 3
        %s206 = scalar_select %p205, %s18, 3
        %s207 = smul.addr %s206, 4
        %s208 = smul.addr %s207, 8
        %s209 = scalar_lea.vmem %s0, %s208
        %p210 = scmp.lt.s32.totalorder %s18, 3
        %s211 = scalar_select %p210, %s18, 3
        %s212 = smul.addr %s211, 4
        %s213 = smul.addr %s212, 8
        %s214 = scalar_lea.vmem %s1, %s213
        %v215 = vld [vmem:[%s209] sm:$0xff]
        %v216 = vld [vmem:[%s209 + $0x8] sm:$0xff]
        %v217 = vld [vmem:[%s209 + $0x10] sm:$0xff]
        %v218 = vld [vmem:[%s209 + $0x18] sm:$0xff]
        %v219 = vld [vmem:[%s214] sm:$0xff]
        %v220 = vld [vmem:[%s214 + $0x8] sm:$0xff]
        %v221 = vld [vmem:[%s214 + $0x10] sm:$0xff]
        %v222 = vld [vmem:[%s214 + $0x18] sm:$0xff]
        %v223 = vld [vmem:[%s2] sm:$0xff]
        %v224 = vld [vmem:[%s2 + $0x8] sm:$0xff]
        %v225 = vld [vmem:[%s2 + $0x10] sm:$0xff]
        %v226 = vld [vmem:[%s2 + $0x18] sm:$0xff]
        %v227 = vld [vmem:[%s2 + $0x20] sm:$0xff]
        %v228 = vld [vmem:[%s2 + $0x28] sm:$0xff]
        %v229 = vld [vmem:[%s2 + $0x30] sm:$0xff]
        %v230 = vld [vmem:[%s2 + $0x38] sm:$0xff]
        %v231 = vld [vmem:[%s2 + $0x40] sm:$0xff]
        %v232 = vld [vmem:[%s2 + $0x48] sm:$0xff]
        %v233 = vld [vmem:[%s2 + $0x50] sm:$0xff]
        %v234 = vld [vmem:[%s2 + $0x58] sm:$0xff]
        %v235 = vld [vmem:[%s2 + $0x60] sm:$0xff]
        %v236 = vld [vmem:[%s2 + $0x68] sm:$0xff]
        %v237 = vld [vmem:[%s2 + $0x70] sm:$0xff]
        %v238 = vld [vmem:[%s2 + $0x78] sm:$0xff]
        %v239 = vld [vmem:[%s2 + $0x80] sm:$0xff]
        %v240 = vld [vmem:[%s2 + $0x88] sm:$0xff]
        %v241 = vld [vmem:[%s2 + $0x90] sm:$0xff]
        %v242 = vld [vmem:[%s2 + $0x98] sm:$0xff]
        %v243 = vld [vmem:[%s3] sm:$0xff]
        %v244 = vld [vmem:[%s3 + $0x8] sm:$0xff]
        %v245 = vld [vmem:[%s3 + $0x10] sm:$0xff]
        %v246 = vld [vmem:[%s3 + $0x18] sm:$0xff]
        %vm247 = vcmask 261120
        %v249 = vsel %vm247, %v227, 0
        %v252 = vsel %vm247, %v228, 0
        %v255 = vsel %vm247, %v229, 0
        %v258 = vsel %vm247, %v230, 0
        %v261 = vsel %vm247, %v231, 0
        %v264 = vsel %vm247, %v232, 0
        %v267 = vsel %vm247, %v233, 0
        %v270 = vsel %vm247, %v234, 0
        %272 = vmatpush.msra.mxu0 0.0
        %273 = vmatpush.msra.mxu0 0.0
        %274 = vmatpush.msra.mxu0 0.0
        %275 = vmatpush.msra.mxu0 0.0
        %276 = vmatpush.msra.mxu0 0.0
        %277 = vmatpush.msra.mxu0 0.0
        %278 = vmatpush.msra.mxu0 0.0
        %279 = vmatpush.msra.mxu0 0.0
        %280 = vmatpush.msra.mxu0 0.0
        %281 = vmatpush.msra.mxu0 0.0
        %282 = vmatpush.msra.mxu0 0.0
        %283 = vmatpush.msra.mxu0 0.0
        %284 = vmatpush.msra.mxu0 %v222
        %285 = vmatpush.msra.mxu0 %v221
        %286 = vmatpush.msra.mxu0 %v220
        %287 = vmatpush.msra.mxu0 %v219
        %288 = vmatmul.f32.gmra.mxu0 %v249
        %v289 = vpop.f32.mrf.mxu0
        %v290 = vadd.f32 0.0, %v289
        %291 = vmatmul.f32.gmra.mxu0 %v252
        %v292 = vpop.f32.mrf.mxu0
        %v293 = vadd.f32 0.0, %v292
        %294 = vmatmul.f32.gmra.mxu0 %v255
        %v295 = vpop.f32.mrf.mxu0
        %v296 = vadd.f32 0.0, %v295
        %297 = vmatmul.f32.gmra.mxu0 %v258
        %v298 = vpop.f32.mrf.mxu0
        %v299 = vadd.f32 0.0, %v298
        %300 = vmatmul.f32.gmra.mxu0 %v261
        %v301 = vpop.f32.mrf.mxu0
        %v302 = vadd.f32 0.0, %v301
        %303 = vmatmul.f32.gmra.mxu0 %v264
        %v304 = vpop.f32.mrf.mxu0
        %v305 = vadd.f32 0.0, %v304
        %306 = vmatmul.f32.gmra.mxu0 %v267
        %v307 = vpop.f32.mrf.mxu0
        %v308 = vadd.f32 0.0, %v307
        %309 = vmatmul.f32.gmra.mxu0 %v270
        %v310 = vpop.f32.mrf.mxu0
        %v311 = vadd.f32 0.0, %v310
        %312 = vdwg.mxu0
        %314 = vset.pattern.permute.xlu0 0
        %315 = vperm.xlu0 %314, %v290
        %v316 = vpop.permute.xlu0 %315
        %319 = vset.pattern.permute.xlu0 0
        %320 = vperm.xlu0 %319, %v293
        %v321 = vpop.permute.xlu0 %320
        %324 = vset.pattern.permute.xlu0 0
        %325 = vperm.xlu0 %324, %v296
        %v326 = vpop.permute.xlu0 %325
        %329 = vset.pattern.permute.xlu0 0
        %330 = vperm.xlu0 %329, %v299
        %v331 = vpop.permute.xlu0 %330
        %v334 = vsel %vm247, %v223, 0
        %v337 = vsel %vm247, %v224, 0
        %v340 = vsel %vm247, %v225, 0
        %v343 = vsel %vm247, %v226, 0
        %345 = vmatpush.msra.mxu0 0.0
        %346 = vmatpush.msra.mxu0 0.0
        %347 = vmatpush.msra.mxu0 0.0
        %348 = vmatpush.msra.mxu0 0.0
        %349 = vmatpush.msra.mxu0 0.0
        %350 = vmatpush.msra.mxu0 0.0
        %351 = vmatpush.msra.mxu0 0.0
        %352 = vmatpush.msra.mxu0 0.0
        %353 = vmatpush.msra.mxu0 0.0
        %354 = vmatpush.msra.mxu0 0.0
        %355 = vmatpush.msra.mxu0 0.0
        %356 = vmatpush.msra.mxu0 0.0
        %357 = vmatpush.msra.mxu0 %v218
        %358 = vmatpush.msra.mxu0 %v217
        %359 = vmatpush.msra.mxu0 %v216
        %360 = vmatpush.msra.mxu0 %v215
        %361 = vmatmul.f32.gmra.mxu0 %v334
        %v362 = vpop.f32.mrf.mxu0
        %v363 = vadd.f32 %v316, %v362
        %364 = vmatmul.f32.gmra.mxu0 %v337
        %v365 = vpop.f32.mrf.mxu0
        %v366 = vadd.f32 %v321, %v365
        %367 = vmatmul.f32.gmra.mxu0 %v340
        %v368 = vpop.f32.mrf.mxu0
        %v369 = vadd.f32 %v326, %v368
        %370 = vmatmul.f32.gmra.mxu0 %v343
        %v371 = vpop.f32.mrf.mxu0
        %v372 = vadd.f32 %v331, %v371
        %373 = vdwg.mxu0
        %v374 = vtanh.pop %v363
        %v375 = vtanh.pop %v366
        %v376 = vtanh.pop %v369
        %v377 = vtanh.pop %v372
        %379 = vset.pattern.permute.xlu0 0
        %380 = vperm.xlu0 %379, %v243
        %v381 = vpop.permute.xlu0 %380
        %384 = vset.pattern.permute.xlu0 0
        %385 = vperm.xlu0 %384, %v244
        %v386 = vpop.permute.xlu0 %385
        %389 = vset.pattern.permute.xlu0 0
        %390 = vperm.xlu0 %389, %v245
        %v391 = vpop.permute.xlu0 %390
        %394 = vset.pattern.permute.xlu0 0
        %395 = vperm.xlu0 %394, %v246
        %v396 = vpop.permute.xlu0 %395
        %v398 = vmul.f32 %v374, %v381
        %v399 = vmul.f32 %v375, %v386
        %v400 = vmul.f32 %v376, %v391
        %v401 = vmul.f32 %v377, %v396
        %vm402 = vcmask 64512
        %v403 = vsel %vm402, %v398, 0.0
        %v404 = vsel %vm402, %v399, 0.0
        %v405 = vadd.f32 %v403, %v404
        %v406 = vsel %vm402, %v400, 0.0
        %v407 = vadd.f32 %v405, %v406
        %v408 = vsel %vm402, %v401, 0.0
        %v409 = vadd.f32 %v407, %v408
        %v410 = vrot.slane %v409, 4
        %v411 = vadd.f32 %v409, %v410
        %v412 = vrot.slane %v411, 2
        %v413 = vadd.f32 %v411, %v412
        %v414 = vrot.slane %v413, 1
        %v415 = vadd.f32 %v413, %v414
        %v416 = vsel %vm402, %v415, -inf
        %417 = vmax.xlane.f32.xlu0 %v416
        %v418 = vpop.xlane.xlu0 %417
        %v419 = vsub.f32 %v415, %v418
        %v420 = vmul.f32 %v419, 1.442695
        %v421 = vpow.pop %v420
        %v422 = vsel %vm402, %v421, 0.0
        %423 = vadd.xlane.f32.xlu0 %v422
        %v424 = vpop.xlane.xlu0 %423
        %v425 = vrcp.pop %v424
        %v426 = vmul.f32 %v421, %v425
        %v427 = vmul.f32 %v215, %v426
        %v428 = vmul.f32 %v216, %v426
        %v429 = vmul.f32 %v217, %v426
        %v430 = vmul.f32 %v218, %v426
        %v431 = vsel %vm402, %v427, 0.0
        %432 = vadd.xlane.f32.xlu0 %v431
        %v433 = vpop.xlane.xlu0 %432
        %v434 = vsel %vm402, %v428, 0.0
        %435 = vadd.xlane.f32.xlu0 %v434
        %v436 = vpop.xlane.xlu0 %435
        %v437 = vsel %vm402, %v429, 0.0
        %438 = vadd.xlane.f32.xlu0 %v437
        %v439 = vpop.xlane.xlu0 %438
        %v440 = vsel %vm402, %v430, 0.0
        %441 = vadd.xlane.f32.xlu0 %v440
        %v442 = vpop.xlane.xlu0 %441
        %v444 = vsel %vm247, %v235, 0
        %v447 = vsel %vm247, %v236, 0
        %v450 = vsel %vm247, %v237, 0
        %v453 = vsel %vm247, %v238, 0
        %455 = vmatpush.msra.mxu0 0.0
        %456 = vmatpush.msra.mxu0 0.0
        %457 = vmatpush.msra.mxu0 0.0
        %458 = vmatpush.msra.mxu0 0.0
        %459 = vmatpush.msra.mxu0 0.0
        %460 = vmatpush.msra.mxu0 0.0
        %461 = vmatpush.msra.mxu0 0.0
        %462 = vmatpush.msra.mxu0 0.0
        %463 = vmatpush.msra.mxu0 0.0
        %464 = vmatpush.msra.mxu0 0.0
        %465 = vmatpush.msra.mxu0 0.0
        %466 = vmatpush.msra.mxu0 0.0
        %467 = vmatpush.msra.mxu0 %v442
        %468 = vmatpush.msra.mxu0 %v439
        %469 = vmatpush.msra.mxu0 %v436
        %470 = vmatpush.msra.mxu0 %v433
        %471 = vmatmul.f32.gmra.mxu0 %v444
        %v472 = vpop.f32.mrf.mxu0
        %v473 = vadd.f32 0.0, %v472
        %474 = vmatmul.f32.gmra.mxu0 %v447
        %v475 = vpop.f32.mrf.mxu0
        %v476 = vadd.f32 0.0, %v475
        %477 = vmatmul.f32.gmra.mxu0 %v450
        %v478 = vpop.f32.mrf.mxu0
        %v479 = vadd.f32 0.0, %v478
        %480 = vmatmul.f32.gmra.mxu0 %v453
        %v481 = vpop.f32.mrf.mxu0
        %v482 = vadd.f32 0.0, %v481
        %483 = vdwg.mxu0
        %v484 = vadd.f32 %v302, %v473
        %v485 = vadd.f32 %v305, %v476
        %v486 = vadd.f32 %v308, %v479
        %v487 = vadd.f32 %v311, %v482
        %488 = vrot.lane.b32.xlu0 %v243, 127
        %v489 = vpop.permute.xlu0 %488
        %490 = vrot.lane.b32.xlu0 %v244, 127
        %v491 = vpop.permute.xlu0 %490
        %492 = vrot.lane.b32.xlu0 %v245, 127
        %v493 = vpop.permute.xlu0 %492
        %494 = vrot.lane.b32.xlu0 %v246, 127
        %v495 = vpop.permute.xlu0 %494
        %v500 = vadd.f32 %v484, %v489
        %v501 = vadd.f32 %v485, %v491
        %v502 = vadd.f32 %v486, %v493
        %v503 = vadd.f32 %v487, %v495
        %v504 = vmax.f32 %v500, 0.0
        %v505 = vmax.f32 %v501, 0.0
        %v506 = vmax.f32 %v502, 0.0
        %v507 = vmax.f32 %v503, 0.0
        %508 = vrot.lane.b32.xlu0 %v243, 126
        %v509 = vpop.permute.xlu0 %508
        %510 = vrot.lane.b32.xlu0 %v244, 126
        %v511 = vpop.permute.xlu0 %510
        %512 = vrot.lane.b32.xlu0 %v245, 126
        %v513 = vpop.permute.xlu0 %512
        %514 = vrot.lane.b32.xlu0 %v246, 126
        %v515 = vpop.permute.xlu0 %514
        %v521 = vsel %vm247, %v239, 0
        %v524 = vsel %vm247, %v240, 0
        %v527 = vsel %vm247, %v241, 0
        %v530 = vsel %vm247, %v242, 0
        %532 = vmatpush.msra.mxu0 0.0
        %533 = vmatpush.msra.mxu0 0.0
        %534 = vmatpush.msra.mxu0 0.0
        %535 = vmatpush.msra.mxu0 0.0
        %536 = vmatpush.msra.mxu0 0.0
        %537 = vmatpush.msra.mxu0 0.0
        %538 = vmatpush.msra.mxu0 0.0
        %539 = vmatpush.msra.mxu0 0.0
        %540 = vmatpush.msra.mxu0 0.0
        %541 = vmatpush.msra.mxu0 0.0
        %542 = vmatpush.msra.mxu0 0.0
        %543 = vmatpush.msra.mxu0 0.0
        %544 = vmatpush.msra.mxu0 %v507
        %545 = vmatpush.msra.mxu0 %v506
        %546 = vmatpush.msra.mxu0 %v505
        %547 = vmatpush.msra.mxu0 %v504
        %548 = vmatmul.f32.gmra.mxu0 %v521
        %v549 = vpop.f32.mrf.mxu0
        %v550 = vadd.f32 %v509, %v549
        %551 = vmatmul.f32.gmra.mxu0 %v524
        %v552 = vpop.f32.mrf.mxu0
        %v553 = vadd.f32 %v511, %v552
        %554 = vmatmul.f32.gmra.mxu0 %v527
        %v555 = vpop.f32.mrf.mxu0
        %v556 = vadd.f32 %v513, %v555
        %557 = vmatmul.f32.gmra.mxu0 %v530
        %v558 = vpop.f32.mrf.mxu0
        %v559 = vadd.f32 %v515, %v558
        %560 = vdwg.mxu0
        %v561 = vmax.f32 %v550, 0.0
        %v562 = vmax.f32 %v553, 0.0
        %v563 = vmax.f32 %v556, 0.0
        %v564 = vmax.f32 %v559, 0.0
        %566 = vset.pattern.permute.xlu0 0
        %567 = vperm.xlu0 %566, %v561
        %v568 = vpop.permute.xlu0 %567
        %571 = vset.pattern.permute.xlu0 0
        %572 = vperm.xlu0 %571, %v562
        %v573 = vpop.permute.xlu0 %572
        %576 = vset.pattern.permute.xlu0 0
        %577 = vperm.xlu0 %576, %v563
        %v578 = vpop.permute.xlu0 %577
        %581 = vset.pattern.permute.xlu0 0
        %582 = vperm.xlu0 %581, %v564
        %v583 = vpop.permute.xlu0 %582
        %v585 = vadd.f32 %v215, %v568
        %v586 = vadd.f32 %v216, %v573
        %v587 = vadd.f32 %v217, %v578
        %v588 = vadd.f32 %v218, %v583
        %v589 = vtanh.pop %v585
        %v590 = vtanh.pop %v586
        %v591 = vtanh.pop %v587
        %v592 = vtanh.pop %v588
        %593 = vset.pattern.permute.xlu0 3
        %594 = vperm.xlu0 %593, %v243
        %v595 = vpop.permute.xlu0 %594
        %597 = vset.pattern.permute.xlu0 3
        %598 = vperm.xlu0 %597, %v244
        %v599 = vpop.permute.xlu0 %598
        %601 = vset.pattern.permute.xlu0 3
        %602 = vperm.xlu0 %601, %v245
        %v603 = vpop.permute.xlu0 %602
        %605 = vset.pattern.permute.xlu0 3
        %606 = vperm.xlu0 %605, %v246
        %v607 = vpop.permute.xlu0 %606
        %v609 = vmul.f32 %v589, %v595
        %v610 = vmul.f32 %v590, %v599
        %v611 = vmul.f32 %v591, %v603
        %v612 = vmul.f32 %v592, %v607
        %v613 = vsel %vm402, %v609, 0.0
        %v614 = vsel %vm402, %v610, 0.0
        %v615 = vadd.f32 %v613, %v614
        %v616 = vsel %vm402, %v611, 0.0
        %v617 = vadd.f32 %v615, %v616
        %v618 = vsel %vm402, %v612, 0.0
        %v619 = vadd.f32 %v617, %v618
        %v620 = vrot.slane %v619, 4
        %v621 = vadd.f32 %v619, %v620
        %v622 = vrot.slane %v621, 2
        %v623 = vadd.f32 %v621, %v622
        %v624 = vrot.slane %v623, 1
        %v625 = vadd.f32 %v623, %v624
        %vm626 = vcmask 57344
        %627 = vst.msk [vmem:[%s204] sm:$0x1] %vm626, %v625
        %s628 = sand.u32 %s120, 1
        %s629 = scalar_lea.sflag [#allocation3], %s628
        %s630 = sand.u32 %s120, 1
        %s631 = scalar_lea.vmem [#allocation2], %s630
        // Predicated region
        $region37: #{tpu_custom_call.1} parent=35 // pred_check
          %p632 = pneg %p130
        $region38: #{tpu_custom_call.1} parent=35 // pred_check_branch
          %634 = sbr.rel (%p632) target = $region40
        $region39: #{tpu_custom_call.1} parent=35 // pred_region
          %636 = vsyncadd %s629, 0
          %s637 = scalar_lea.hbm %s4, %s18
          %s639 = sshll.u32 %s631, 4
          %s640 = int_to_ptr.vmem [resolvable:$true] %s639
          %s641 = sshll.u32 %s637, 4
          %s642 = int_to_ptr.hbm [resolvable:$true] %s641
          %644 = dma.vmem_to_hbm [thread:$0]  %s640, 16, %s642, %s629
        $region40: #{tpu_custom_call.1} parent=35 // pred_fallthru
          _
      $region36: #{tpu_custom_call.1} parent=5 // pred_fallthru
        _
      %p645 = scmp.le.s32.totalorder 2, %s13
      // Predicated region
      $region41: #{tpu_custom_call.1} parent=5 // pred_check
        %p646 = pneg %p645
      $region42: #{tpu_custom_call.1} parent=5 // pred_check_branch
        %648 = sbr.rel (%p646) target = $region44
      $region43: #{tpu_custom_call.1} parent=5 // pred_region
        %s649 = ssub.s32 %s13, 2
        // Predicated region
        $region45: #{tpu_custom_call.1} parent=43 // pred_check
          %p650 = pneg %p136
        $region46: #{tpu_custom_call.1} parent=43 // pred_check_branch
          %652 = sbr.rel (%p650) target = $region48
        $region47: #{tpu_custom_call.1} parent=43 // pred_region
          %s653 = sand.u32 %s121, 1
          %s654 = scalar_lea.sflag [#allocation3], %s653
          %s655 = sand.u32 %s121, 1
          %s656 = scalar_lea.vmem [#allocation2], %s655
          %658 = dma.done %s654, 16
        $region48: #{tpu_custom_call.1} parent=43 // pred_fallthru
          _
      $region44: #{tpu_custom_call.1} parent=5 // pred_fallthru
        _
    $region6: #{tpu_custom_call.1} parent=1 // loop_footer
      %s17 = sadd.s32 1, %s13
    $region7: #{tpu_custom_call.1} parent=1 // loop_footer_branch
      %12 = sbr.rel target = $region3
    $region8: #{tpu_custom_call.1} parent=1 // loop_exit
      _
    %659 = vsyncpa [#allocation3], 1
    %s660 = scalar_lea.sflag [#allocation3], 1
    %661 = vsyncpa %s660, 1

</llo_original>
